<compile_context>
chip_gen: v5e
topology: v5e:2x2
jax: 0.10.0
libtpu: 0.0.40
codegen_flags: <defaults>
</compile_context>

<pallas_src>
import functools

import jax
import jax.numpy as jnp
from jax.experimental import pallas as pl
from jax.experimental.pallas import tpu as pltpu

INPUT_SIZE = 784
HIDDEN_SIZE = 500
NUM_CLASSES = 10

LANE = 128
SUBLANE = 8


def _round_up(n, m):
    return ((n + m - 1) // m) * m


def _mlp_kernel(x_ref, w1_ref, b1_ref, w2_ref, b2_ref, o_ref):
    # Layer 1: MXU matmul with f32 accumulation, bias add + ReLU in f32.
    h = jnp.dot(x_ref[...], w1_ref[...], preferred_element_type=jnp.float32)
    h = jnp.maximum(h + b1_ref[...], 0.0)           # b1 is (1, H_pad) -> broadcasts
    # Layer 2: cast activations only if weights are stored narrow (bf16);
    # astype is a no-op when dtypes already match.
    out = jnp.dot(h.astype(w2_ref.dtype), w2_ref[...],
                  preferred_element_type=jnp.float32)
    o_ref[...] = (out + b2_ref[...]).astype(o_ref.dtype)   # lane-dense (TILE_B, 128) store


def neural_net_forward(x, w1, b1, w2, b2, *, tile_b=256, weight_dtype=None):
    """x: [B, input_size] f32. Returns logits [B, num_classes] f32.

    tile_b: batch rows per grid step (256 recommended for v6e/v7x, 128 for v5e).
    weight_dtype: optionally store weights in bf16 (v6e/v7x) to halve weight DMA.
    """
    B, in_dim = x.shape
    H = w1.shape[1]
    C = w2.shape[1]

    # Pad the hidden dim and the output (class) dim up to full 128-lane tiles.
    H_pad = _round_up(H, LANE)
    C_pad = _round_up(C, LANE)

    # Choose a batch tile (multiple of 8 sublanes) and pad the batch to it.
    tile_b = min(tile_b, _round_up(B, SUBLANE))
    tile_b = _round_up(tile_b, SUBLANE)
    B_pad = _round_up(B, tile_b)

    x_p = x if B_pad == B else jnp.pad(x, ((0, B_pad - B), (0, 0)))
    w1_p = jnp.pad(w1, ((0, 0), (0, H_pad - H)))
    b1_p = jnp.pad(b1, (0, H_pad - H)).reshape(1, H_pad)
    w2_p = jnp.pad(w2, ((0, H_pad - H), (0, C_pad - C)))
    b2_p = jnp.pad(b2, (0, C_pad - C)).reshape(1, C_pad)

    if weight_dtype is not None:
        # bf16 weight storage (f32 accumulation inside the kernel). Recommended
        # on v6e/v7x only; keep f32 on v5e (no bf16 VPU path).
        w1_p = w1_p.astype(weight_dtype)
        w2_p = w2_p.astype(weight_dtype)

    num_batch_tiles = B_pad // tile_b

    cost = pl.CostEstimate(
        flops=2 * B * (in_dim * H + H * C),
        transcendentals=0,
        bytes_accessed=4 * (x.size + w1.size + b1.size + w2.size + b2.size + B * C),
    )

    out_padded = pl.pallas_call(
        _mlp_kernel,
        out_shape=jax.ShapeDtypeStruct((B_pad, C_pad), jnp.float32),
        grid_spec=pl.GridSpec(
            grid=(num_batch_tiles,),
            in_specs=[
                # Activations: streamed / double-buffered per batch tile.
                pl.BlockSpec((tile_b, in_dim), lambda i: (i, 0)),
                # Weights & biases: constant block index -> VMEM-resident across steps.
                pl.BlockSpec((in_dim, H_pad), lambda i: (0, 0)),
                pl.BlockSpec((1, H_pad), lambda i: (0, 0)),
                pl.BlockSpec((H_pad, C_pad), lambda i: (0, 0)),
                pl.BlockSpec((1, C_pad), lambda i: (0, 0)),
            ],
            out_specs=pl.BlockSpec((tile_b, C_pad), lambda i: (i, 0)),
        ),
        compiler_params=pltpu.CompilerParams(
            dimension_semantics=("parallel",)),   # megacore sharding on v7x
        cost_estimate=cost,
    )(x_p, w1_p, b1_p, w2_p, b2_p)

    # Strip batch and class padding in the wrapper (cheap XLA slice).
    return out_padded[:B, :C]


def init_params(key):
    """Deterministic init mirroring PyTorch nn.Linear default
    (U[-1/sqrt(fan_in), +1/sqrt(fan_in)])."""
    k1, k2, k3, k4 = jax.random.split(key, 4)
    bound1 = 1.0 / jnp.sqrt(INPUT_SIZE)
    bound2 = 1.0 / jnp.sqrt(HIDDEN_SIZE)
    w1 = jax.random.uniform(k1, (INPUT_SIZE, HIDDEN_SIZE), jnp.float32,
                            -bound1, bound1)
    b1 = jax.random.uniform(k2, (HIDDEN_SIZE,), jnp.float32, -bound1, bound1)
    w2 = jax.random.uniform(k3, (HIDDEN_SIZE, NUM_CLASSES), jnp.float32,
                            -bound2, bound2)
    b2 = jax.random.uniform(k4, (NUM_CLASSES,), jnp.float32, -bound2, bound2)
    return w1, b1, w2, b2


if __name__ == "__main__":
    key = jax.random.PRNGKey(0)
    k_param, k_x = jax.random.split(key)
    w1, b1, w2, b2 = init_params(k_param)

    batch = 8
    x = jax.random.normal(k_x, (batch, INPUT_SIZE), jnp.float32)

    fwd = jax.jit(functools.partial(neural_net_forward, tile_b=256))
    logits = fwd(x, w1, b1, w2, b2)
    logits = jax.block_until_ready(logits)

    # Reference check in plain JAX (unpadded f32 math).
    ref = jnp.maximum(x @ w1 + b1, 0.0) @ w2 + b2
    assert logits.shape == (batch, NUM_CLASSES)
    assert jnp.allclose(logits, ref, atol=1e-4, rtol=1e-4)

    print("KERNEL_OK")
</pallas_src>

<mosaic_0001>
module attributes {stable_mosaic.version = 11 : i64} {
  func.func @_mlp_kernel(%arg0: i32, %arg1: memref<8x784xf32, #tpu.memory_space<vmem>>, %arg2: memref<784x512xf32, #tpu.memory_space<vmem>>, %arg3: memref<1x512xf32, #tpu.memory_space<vmem>>, %arg4: memref<512x128xf32, #tpu.memory_space<vmem>>, %arg5: memref<1x128xf32, #tpu.memory_space<vmem>>, %arg6: memref<8x128xf32, #tpu.memory_space<vmem>>) attributes {dimension_semantics = [#tpu.dimension_semantics<parallel>], iteration_bounds = array<i64: 1>, scalar_prefetch = 0 : i64, scratch_operands = 0 : i64, tpu.core_type = #tpu.core_type<tc>, window_params = [{transform_indices = @transform_0, window_bounds = array<i64: 8, 784>}, {pipeline_mode = #tpu.pipeline_mode<synchronous>, transform_indices = @transform_1, window_bounds = array<i64: 784, 512>}, {pipeline_mode = #tpu.pipeline_mode<synchronous>, transform_indices = @transform_2, window_bounds = array<i64: 1, 512>}, {pipeline_mode = #tpu.pipeline_mode<synchronous>, transform_indices = @transform_3, window_bounds = array<i64: 512, 128>}, {pipeline_mode = #tpu.pipeline_mode<synchronous>, transform_indices = @transform_4, window_bounds = array<i64: 1, 128>}, {transform_indices = @transform_5, window_bounds = array<i64: 8, 128>}]} {
    %c0 = arith.constant 0 : index
    %c0_0 = arith.constant 0 : index
    %0 = vector.load %arg1[%c0, %c0_0] : memref<8x784xf32, #tpu.memory_space<vmem>>, vector<8x784xf32>
    %c0_1 = arith.constant 0 : index
    %c0_2 = arith.constant 0 : index
    %1 = vector.load %arg2[%c0_1, %c0_2] : memref<784x512xf32, #tpu.memory_space<vmem>>, vector<784x512xf32>
    %cst = arith.constant dense<0.000000e+00> : vector<8x512xf32>
    %2 = tpu.matmul %0, %1, %cst {dimension_numbers = #tpu.dot_dimension_numbers<[1], [0], [0], [1], [0, 0, 1, 1], [], []>} : vector<8x784xf32>, vector<784x512xf32>, vector<8x512xf32> -> vector<8x512xf32>
    %c0_3 = arith.constant 0 : index
    %c0_4 = arith.constant 0 : index
    %3 = vector.load %arg3[%c0_3, %c0_4] : memref<1x512xf32, #tpu.memory_space<vmem>>, vector<1x512xf32>
    %4 = vector.broadcast %3 : vector<1x512xf32> to vector<8x512xf32>
    %5 = arith.addf %2, %4 : vector<8x512xf32>
    %cst_5 = arith.constant 0.000000e+00 : f32
    %6 = vector.broadcast %cst_5 : f32 to vector<8x512xf32>
    %7 = arith.maximumf %5, %6 : vector<8x512xf32>
    %c0_6 = arith.constant 0 : index
    %c0_7 = arith.constant 0 : index
    %8 = vector.load %arg4[%c0_6, %c0_7] : memref<512x128xf32, #tpu.memory_space<vmem>>, vector<512x128xf32>
    %cst_8 = arith.constant dense<0.000000e+00> : vector<8x128xf32>
    %9 = tpu.matmul %7, %8, %cst_8 {dimension_numbers = #tpu.dot_dimension_numbers<[1], [0], [0], [1], [0, 0, 1, 1], [], []>} : vector<8x512xf32>, vector<512x128xf32>, vector<8x128xf32> -> vector<8x128xf32>
    %c0_9 = arith.constant 0 : index
    %c0_10 = arith.constant 0 : index
    %10 = vector.load %arg5[%c0_9, %c0_10] : memref<1x128xf32, #tpu.memory_space<vmem>>, vector<1x128xf32>
    %11 = vector.broadcast %10 : vector<1x128xf32> to vector<8x128xf32>
    %12 = arith.addf %9, %11 : vector<8x128xf32>
    %c0_11 = arith.constant 0 : index
    %c0_12 = arith.constant 0 : index
    %13 = vector.load %arg6[%c0_11, %c0_12] : memref<8x128xf32, #tpu.memory_space<vmem>>, vector<8x128xf32>
    tpu.vector_store %arg6[%c0_11, %c0_12], %12 {strides = array<i32>} : memref<8x128xf32, #tpu.memory_space<vmem>>, vector<8x128xf32>,
    return
  }
  func.func @transform_0(%arg0: i32) -> (i32, i32) {
    %c0_i32 = arith.constant 0 : i32
    %c0_i32_0 = arith.constant 0 : i32
    return %arg0, %c0_i32 : i32, i32
  }
  func.func @transform_1(%arg0: i32) -> (i32, i32) {
    %c0_i32 = arith.constant 0 : i32
    %c0_i32_0 = arith.constant 0 : i32
    %c0_i32_1 = arith.constant 0 : i32
    return %c0_i32, %c0_i32_0 : i32, i32
  }
  func.func @transform_2(%arg0: i32) -> (i32, i32) {
    %c0_i32 = arith.constant 0 : i32
    %c0_i32_0 = arith.constant 0 : i32
    %c0_i32_1 = arith.constant 0 : i32
    return %c0_i32, %c0_i32_0 : i32, i32
  }
  func.func @transform_3(%arg0: i32) -> (i32, i32) {
    %c0_i32 = arith.constant 0 : i32
    %c0_i32_0 = arith.constant 0 : i32
    %c0_i32_1 = arith.constant 0 : i32
    return %c0_i32, %c0_i32_0 : i32, i32
  }
  func.func @transform_4(%arg0: i32) -> (i32, i32) {
    %c0_i32 = arith.constant 0 : i32
    %c0_i32_0 = arith.constant 0 : i32
    %c0_i32_1 = arith.constant 0 : i32
    return %c0_i32, %c0_i32_0 : i32, i32
  }
  func.func @transform_5(%arg0: i32) -> (i32, i32) {
    %c0_i32 = arith.constant 0 : i32
    %c0_i32_0 = arith.constant 0 : i32
    return %arg0, %c0_i32 : i32, i32
  }
}

</mosaic_0001>

<llo_original>
// kernel: neural_net_forward.1
$region0: #{neural_net_forward.1}
  #allocation0 [shape = 'u32[]', space=smem, size = 0x4, offset = 0x4, fixed_abs, tag = 'smem constant byte address 0x4 - core index']
  #allocation1 [shape = 'u32[72,128]{1,0:T(1,128)}', space=vmem, size = 0x9000, scoped, tag = 'internal scratch']
  %s0 = inlined_call_operand.vmem [shape: f32[8,784], index: 0, kind: input, shape index: {}]
  %s1 = inlined_call_operand.vmem [shape: f32[784,512], index: 1, kind: input, shape index: {}]
  %s2 = inlined_call_operand.vmem [shape: f32[1,512], index: 2, kind: input, shape index: {}]
  %s3 = inlined_call_operand.vmem [shape: f32[512,128], index: 3, kind: input, shape index: {}]
  %s4 = inlined_call_operand.vmem [shape: f32[1,128], index: 4, kind: input, shape index: {}]
  %s5 = inlined_call_operand.hbm [shape: f32[8,128], index: 5, kind: output, shape index: {}]
  %s6 = sld [smem:[#allocation0]]
  $region30: #{neural_net_forward.1} parent=0
    _
  %s8 = ssub.s32 1, %s6
  %s9 = scalar_select 0, %s8, %s6
  $region1: #{neural_net_forward.1} parent=0
    #allocation2 [shape = 'u8[4096]{0}', space=vmem, size = 0x1000, scoped, tag = 'output window, operand 0, single buffered']
    #allocation3 [shape = 's32[1]{0}', space=sflag, size = 0x4, scoped, tag = 'scoped memory for neural_net_forward.1']
    %10 = vsyncpa [#allocation3], 0
    // Predicated region
    $region2: #{neural_net_forward.1} parent=1 // pred_check
      _
    $region3: #{neural_net_forward.1} parent=1 // pred_check_branch
      %12 = sbr.rel (0) target = $region5
    $region4: #{neural_net_forward.1} parent=1 // pred_region
      _
    $region5: #{neural_net_forward.1} parent=1 // pred_fallthru
      _
    // Predicated region
    $region6: #{neural_net_forward.1} parent=1 // pred_check
      _
    $region7: #{neural_net_forward.1} parent=1 // pred_check_branch
      %14 = sbr.rel (0) target = $region9
    $region8: #{neural_net_forward.1} parent=1 // pred_region
      _
    $region9: #{neural_net_forward.1} parent=1 // pred_fallthru
      _
    // Predicated region
    $region10: #{neural_net_forward.1} parent=1 // pred_check
      _
    $region11: #{neural_net_forward.1} parent=1 // pred_check_branch
      %16 = sbr.rel (0) target = $region13
    $region12: #{neural_net_forward.1} parent=1 // pred_region
      _
    $region13: #{neural_net_forward.1} parent=1 // pred_fallthru
      _
    // Predicated region
    $region14: #{neural_net_forward.1} parent=1 // pred_check
      _
    $region15: #{neural_net_forward.1} parent=1 // pred_check_branch
      %18 = sbr.rel (0) target = $region17
    $region16: #{neural_net_forward.1} parent=1 // pred_region
      _
    $region17: #{neural_net_forward.1} parent=1 // pred_fallthru
      _
    // Predicated region
    $region18: #{neural_net_forward.1} parent=1 // pred_check
      _
    $region19: #{neural_net_forward.1} parent=1 // pred_check_branch
      %20 = sbr.rel (0) target = $region21
    $region20: #{neural_net_forward.1} parent=1 // pred_region
      _
    $region21: #{neural_net_forward.1} parent=1 // pred_fallthru
      _
    %v21 = vld [vmem:[%s0] sm:$0xff]
    %v22 = vld [vmem:[%s0 + $0x8] sm:$0xff]
    %v23 = vld [vmem:[%s0 + $0x10] sm:$0xff]
    %v24 = vld [vmem:[%s0 + $0x18] sm:$0xff]
    %v25 = vld [vmem:[%s0 + $0x20] sm:$0xff]
    %v26 = vld [vmem:[%s0 + $0x28] sm:$0xff]
    %v27 = vld [vmem:[%s0 + $0x30] sm:$0xff]
    %v28 = vld [vmem:[%s1] sm:$0xff]
    %v29 = vld [vmem:[%s1 + $0x8] sm:$0xff]
    %v30 = vld [vmem:[%s1 + $0x10] sm:$0xff]
    %v31 = vld [vmem:[%s1 + $0x18] sm:$0xff]
    %v32 = vld [vmem:[%s1 + $0x20] sm:$0xff]
    %v33 = vld [vmem:[%s1 + $0x28] sm:$0xff]
    %v34 = vld [vmem:[%s1 + $0x30] sm:$0xff]
    %v35 = vld [vmem:[%s1 + $0x38] sm:$0xff]
    %v36 = vld [vmem:[%s1 + $0x40] sm:$0xff]
    %v37 = vld [vmem:[%s1 + $0x48] sm:$0xff]
    %v38 = vld [vmem:[%s1 + $0x50] sm:$0xff]
    %v39 = vld [vmem:[%s1 + $0x58] sm:$0xff]
    %v40 = vld [vmem:[%s1 + $0x60] sm:$0xff]
    %v41 = vld [vmem:[%s1 + $0x68] sm:$0xff]
    %v42 = vld [vmem:[%s1 + $0x70] sm:$0xff]
    %v43 = vld [vmem:[%s1 + $0x78] sm:$0xff]
    %v44 = vld [vmem:[%s1 + $0x80] sm:$0xff]
    %v45 = vld [vmem:[%s1 + $0x88] sm:$0xff]
    %v46 = vld [vmem:[%s1 + $0x90] sm:$0xff]
    %v47 = vld [vmem:[%s1 + $0x98] sm:$0xff]
    %v48 = vld [vmem:[%s1 + $0xa0] sm:$0xff]
    %v49 = vld [vmem:[%s1 + $0xa8] sm:$0xff]
    %v50 = vld [vmem:[%s1 + $0xb0] sm:$0xff]
    %v51 = vld [vmem:[%s1 + $0xb8] sm:$0xff]
    %v52 = vld [vmem:[%s1 + $0xc0] sm:$0xff]
    %v53 = vld [vmem:[%s1 + $0xc8] sm:$0xff]
    %v54 = vld [vmem:[%s1 + $0xd0] sm:$0xff]
    %v55 = vld [vmem:[%s1 + $0xd8] sm:$0xff]
    %v56 = vld [vmem:[%s1 + $0xe0] sm:$0xff]
    %v57 = vld [vmem:[%s1 + $0xe8] sm:$0xff]
    %v58 = vld [vmem:[%s1 + $0xf0] sm:$0xff]
    %v59 = vld [vmem:[%s1 + $0xf8] sm:$0xff]
    %v60 = vld [vmem:[%s1 + $0x100] sm:$0xff]
    %v61 = vld [vmem:[%s1 + $0x108] sm:$0xff]
    %v62 = vld [vmem:[%s1 + $0x110] sm:$0xff]
    %v63 = vld [vmem:[%s1 + $0x118] sm:$0xff]
    %v64 = vld [vmem:[%s1 + $0x120] sm:$0xff]
    %v65 = vld [vmem:[%s1 + $0x128] sm:$0xff]
    %v66 = vld [vmem:[%s1 + $0x130] sm:$0xff]
    %v67 = vld [vmem:[%s1 + $0x138] sm:$0xff]
    %v68 = vld [vmem:[%s1 + $0x140] sm:$0xff]
    %v69 = vld [vmem:[%s1 + $0x148] sm:$0xff]
    %v70 = vld [vmem:[%s1 + $0x150] sm:$0xff]
    %v71 = vld [vmem:[%s1 + $0x158] sm:$0xff]
    %v72 = vld [vmem:[%s1 + $0x160] sm:$0xff]
    %v73 = vld [vmem:[%s1 + $0x168] sm:$0xff]
    %v74 = vld [vmem:[%s1 + $0x170] sm:$0xff]
    %v75 = vld [vmem:[%s1 + $0x178] sm:$0xff]
    %v76 = vld [vmem:[%s1 + $0x180] sm:$0xff]
    %v77 = vld [vmem:[%s1 + $0x188] sm:$0xff]
    %v78 = vld [vmem:[%s1 + $0x190] sm:$0xff]
    %v79 = vld [vmem:[%s1 + $0x198] sm:$0xff]
    %v80 = vld [vmem:[%s1 + $0x1a0] sm:$0xff]
    %v81 = vld [vmem:[%s1 + $0x1a8] sm:$0xff]
    %v82 = vld [vmem:[%s1 + $0x1b0] sm:$0xff]
    %v83 = vld [vmem:[%s1 + $0x1b8] sm:$0xff]
    %v84 = vld [vmem:[%s1 + $0x1c0] sm:$0xff]
    %v85 = vld [vmem:[%s1 + $0x1c8] sm:$0xff]
    %v86 = vld [vmem:[%s1 + $0x1d0] sm:$0xff]
    %v87 = vld [vmem:[%s1 + $0x1d8] sm:$0xff]
    %v88 = vld [vmem:[%s1 + $0x1e0] sm:$0xff]
    %v89 = vld [vmem:[%s1 + $0x1e8] sm:$0xff]
    %v90 = vld [vmem:[%s1 + $0x1f0] sm:$0xff]
    %v91 = vld [vmem:[%s1 + $0x1f8] sm:$0xff]
    %v92 = vld [vmem:[%s1 + $0x200] sm:$0xff]
    %v93 = vld [vmem:[%s1 + $0x208] sm:$0xff]
    %v94 = vld [vmem:[%s1 + $0x210] sm:$0xff]
    %v95 = vld [vmem:[%s1 + $0x218] sm:$0xff]
    %v96 = vld [vmem:[%s1 + $0x220] sm:$0xff]
    %v97 = vld [vmem:[%s1 + $0x228] sm:$0xff]
    %v98 = vld [vmem:[%s1 + $0x230] sm:$0xff]
    %v99 = vld [vmem:[%s1 + $0x238] sm:$0xff]
    %v100 = vld [vmem:[%s1 + $0x240] sm:$0xff]
    %v101 = vld [vmem:[%s1 + $0x248] sm:$0xff]
    %v102 = vld [vmem:[%s1 + $0x250] sm:$0xff]
    %v103 = vld [vmem:[%s1 + $0x258] sm:$0xff]
    %v104 = vld [vmem:[%s1 + $0x260] sm:$0xff]
    %v105 = vld [vmem:[%s1 + $0x268] sm:$0xff]
    %v106 = vld [vmem:[%s1 + $0x270] sm:$0xff]
    %v107 = vld [vmem:[%s1 + $0x278] sm:$0xff]
    %v108 = vld [vmem:[%s1 + $0x280] sm:$0xff]
    %v109 = vld [vmem:[%s1 + $0x288] sm:$0xff]
    %v110 = vld [vmem:[%s1 + $0x290] sm:$0xff]
    %v111 = vld [vmem:[%s1 + $0x298] sm:$0xff]
    %v112 = vld [vmem:[%s1 + $0x2a0] sm:$0xff]
    %v113 = vld [vmem:[%s1 + $0x2a8] sm:$0xff]
    %v114 = vld [vmem:[%s1 + $0x2b0] sm:$0xff]
    %v115 = vld [vmem:[%s1 + $0x2b8] sm:$0xff]
    %v116 = vld [vmem:[%s1 + $0x2c0] sm:$0xff]
    %v117 = vld [vmem:[%s1 + $0x2c8] sm:$0xff]
    %v118 = vld [vmem:[%s1 + $0x2d0] sm:$0xff]
    %v119 = vld [vmem:[%s1 + $0x2d8] sm:$0xff]
    %v120 = vld [vmem:[%s1 + $0x2e0] sm:$0xff]
    %v121 = vld [vmem:[%s1 + $0x2e8] sm:$0xff]
    %v122 = vld [vmem:[%s1 + $0x2f0] sm:$0xff]
    %v123 = vld [vmem:[%s1 + $0x2f8] sm:$0xff]
    %v124 = vld [vmem:[%s1 + $0x300] sm:$0xff]
    %v125 = vld [vmem:[%s1 + $0x308] sm:$0xff]
    %v126 = vld [vmem:[%s1 + $0x310] sm:$0xff]
    %v127 = vld [vmem:[%s1 + $0x318] sm:$0xff]
    %v128 = vld [vmem:[%s1 + $0x320] sm:$0xff]
    %v129 = vld [vmem:[%s1 + $0x328] sm:$0xff]
    %v130 = vld [vmem:[%s1 + $0x330] sm:$0xff]
    %v131 = vld [vmem:[%s1 + $0x338] sm:$0xff]
    %v132 = vld [vmem:[%s1 + $0x340] sm:$0xff]
    %v133 = vld [vmem:[%s1 + $0x348] sm:$0xff]
    %v134 = vld [vmem:[%s1 + $0x350] sm:$0xff]
    %v135 = vld [vmem:[%s1 + $0x358] sm:$0xff]
    %v136 = vld [vmem:[%s1 + $0x360] sm:$0xff]
    %v137 = vld [vmem:[%s1 + $0x368] sm:$0xff]
    %v138 = vld [vmem:[%s1 + $0x370] sm:$0xff]
    %v139 = vld [vmem:[%s1 + $0x378] sm:$0xff]
    %v140 = vld [vmem:[%s1 + $0x380] sm:$0xff]
    %v141 = vld [vmem:[%s1 + $0x388] sm:$0xff]
    %v142 = vld [vmem:[%s1 + $0x390] sm:$0xff]
    %v143 = vld [vmem:[%s1 + $0x398] sm:$0xff]
    %v144 = vld [vmem:[%s1 + $0x3a0] sm:$0xff]
    %v145 = vld [vmem:[%s1 + $0x3a8] sm:$0xff]
    %v146 = vld [vmem:[%s1 + $0x3b0] sm:$0xff]
    %v147 = vld [vmem:[%s1 + $0x3b8] sm:$0xff]
    %v148 = vld [vmem:[%s1 + $0x3c0] sm:$0xff]
    %v149 = vld [vmem:[%s1 + $0x3c8] sm:$0xff]
    %v150 = vld [vmem:[%s1 + $0x3d0] sm:$0xff]
    %v151 = vld [vmem:[%s1 + $0x3d8] sm:$0xff]
    %v152 = vld [vmem:[%s1 + $0x3e0] sm:$0xff]
    %v153 = vld [vmem:[%s1 + $0x3e8] sm:$0xff]
    %v154 = vld [vmem:[%s1 + $0x3f0] sm:$0xff]
    %v155 = vld [vmem:[%s1 + $0x3f8] sm:$0xff]
    %v156 = vld [vmem:[%s1 + $0x400] sm:$0xff]
    %v157 = vld [vmem:[%s1 + $0x408] sm:$0xff]
    %v158 = vld [vmem:[%s1 + $0x410] sm:$0xff]
    %v159 = vld [vmem:[%s1 + $0x418] sm:$0xff]
    %v160 = vld [vmem:[%s1 + $0x420] sm:$0xff]
    %v161 = vld [vmem:[%s1 + $0x428] sm:$0xff]
    %v162 = vld [vmem:[%s1 + $0x430] sm:$0xff]
    %v163 = vld [vmem:[%s1 + $0x438] sm:$0xff]
    %v164 = vld [vmem:[%s1 + $0x440] sm:$0xff]
    %v165 = vld [vmem:[%s1 + $0x448] sm:$0xff]
    %v166 = vld [vmem:[%s1 + $0x450] sm:$0xff]
    %v167 = vld [vmem:[%s1 + $0x458] sm:$0xff]
    %v168 = vld [vmem:[%s1 + $0x460] sm:$0xff]
    %v169 = vld [vmem:[%s1 + $0x468] sm:$0xff]
    %v170 = vld [vmem:[%s1 + $0x470] sm:$0xff]
    %v171 = vld [vmem:[%s1 + $0x478] sm:$0xff]
    %v172 = vld [vmem:[%s1 + $0x480] sm:$0xff]
    %v173 = vld [vmem:[%s1 + $0x488] sm:$0xff]
    %v174 = vld [vmem:[%s1 + $0x490] sm:$0xff]
    %v175 = vld [vmem:[%s1 + $0x498] sm:$0xff]
    %v176 = vld [vmem:[%s1 + $0x4a0] sm:$0xff]
    %v177 = vld [vmem:[%s1 + $0x4a8] sm:$0xff]
    %v178 = vld [vmem:[%s1 + $0x4b0] sm:$0xff]
    %v179 = vld [vmem:[%s1 + $0x4b8] sm:$0xff]
    %v180 = vld [vmem:[%s1 + $0x4c0] sm:$0xff]
    %v181 = vld [vmem:[%s1 + $0x4c8] sm:$0xff]
    %v182 = vld [vmem:[%s1 + $0x4d0] sm:$0xff]
    %v183 = vld [vmem:[%s1 + $0x4d8] sm:$0xff]
    %v184 = vld [vmem:[%s1 + $0x4e0] sm:$0xff]
    %v185 = vld [vmem:[%s1 + $0x4e8] sm:$0xff]
    %v186 = vld [vmem:[%s1 + $0x4f0] sm:$0xff]
    %v187 = vld [vmem:[%s1 + $0x4f8] sm:$0xff]
    %v188 = vld [vmem:[%s1 + $0x500] sm:$0xff]
    %v189 = vld [vmem:[%s1 + $0x508] sm:$0xff]
    %v190 = vld [vmem:[%s1 + $0x510] sm:$0xff]
    %v191 = vld [vmem:[%s1 + $0x518] sm:$0xff]
    %v192 = vld [vmem:[%s1 + $0x520] sm:$0xff]
    %v193 = vld [vmem:[%s1 + $0x528] sm:$0xff]
    %v194 = vld [vmem:[%s1 + $0x530] sm:$0xff]
    %v195 = vld [vmem:[%s1 + $0x538] sm:$0xff]
    %v196 = vld [vmem:[%s1 + $0x540] sm:$0xff]
    %v197 = vld [vmem:[%s1 + $0x548] sm:$0xff]
    %v198 = vld [vmem:[%s1 + $0x550] sm:$0xff]
    %v199 = vld [vmem:[%s1 + $0x558] sm:$0xff]
    %v200 = vld [vmem:[%s1 + $0x560] sm:$0xff]
    %v201 = vld [vmem:[%s1 + $0x568] sm:$0xff]
    %v202 = vld [vmem:[%s1 + $0x570] sm:$0xff]
    %v203 = vld [vmem:[%s1 + $0x578] sm:$0xff]
    %v204 = vld [vmem:[%s1 + $0x580] sm:$0xff]
    %v205 = vld [vmem:[%s1 + $0x588] sm:$0xff]
    %v206 = vld [vmem:[%s1 + $0x590] sm:$0xff]
    %v207 = vld [vmem:[%s1 + $0x598] sm:$0xff]
    %v208 = vld [vmem:[%s1 + $0x5a0] sm:$0xff]
    %v209 = vld [vmem:[%s1 + $0x5a8] sm:$0xff]
    %v210 = vld [vmem:[%s1 + $0x5b0] sm:$0xff]
    %v211 = vld [vmem:[%s1 + $0x5b8] sm:$0xff]
    %v212 = vld [vmem:[%s1 + $0x5c0] sm:$0xff]
    %v213 = vld [vmem:[%s1 + $0x5c8] sm:$0xff]
    %v214 = vld [vmem:[%s1 + $0x5d0] sm:$0xff]
    %v215 = vld [vmem:[%s1 + $0x5d8] sm:$0xff]
    %v216 = vld [vmem:[%s1 + $0x5e0] sm:$0xff]
    %v217 = vld [vmem:[%s1 + $0x5e8] sm:$0xff]
    %v218 = vld [vmem:[%s1 + $0x5f0] sm:$0xff]
    %v219 = vld [vmem:[%s1 + $0x5f8] sm:$0xff]
    %v220 = vld [vmem:[%s1 + $0x600] sm:$0xff]
    %v221 = vld [vmem:[%s1 + $0x608] sm:$0xff]
    %v222 = vld [vmem:[%s1 + $0x610] sm:$0xff]
    %v223 = vld [vmem:[%s1 + $0x618] sm:$0xff]
    %v224 = vld [vmem:[%s1 + $0x620] sm:$0xff]
    %v225 = vld [vmem:[%s1 + $0x628] sm:$0xff]
    %v226 = vld [vmem:[%s1 + $0x630] sm:$0xff]
    %v227 = vld [vmem:[%s1 + $0x638] sm:$0xff]
    %v228 = vld [vmem:[%s1 + $0x640] sm:$0xff]
    %v229 = vld [vmem:[%s1 + $0x648] sm:$0xff]
    %v230 = vld [vmem:[%s1 + $0x650] sm:$0xff]
    %v231 = vld [vmem:[%s1 + $0x658] sm:$0xff]
    %v232 = vld [vmem:[%s1 + $0x660] sm:$0xff]
    %v233 = vld [vmem:[%s1 + $0x668] sm:$0xff]
    %v234 = vld [vmem:[%s1 + $0x670] sm:$0xff]
    %v235 = vld [vmem:[%s1 + $0x678] sm:$0xff]
    %v236 = vld [vmem:[%s1 + $0x680] sm:$0xff]
    %v237 = vld [vmem:[%s1 + $0x688] sm:$0xff]
    %v238 = vld [vmem:[%s1 + $0x690] sm:$0xff]
    %v239 = vld [vmem:[%s1 + $0x698] sm:$0xff]
    %v240 = vld [vmem:[%s1 + $0x6a0] sm:$0xff]
    %v241 = vld [vmem:[%s1 + $0x6a8] sm:$0xff]
    %v242 = vld [vmem:[%s1 + $0x6b0] sm:$0xff]
    %v243 = vld [vmem:[%s1 + $0x6b8] sm:$0xff]
    %v244 = vld [vmem:[%s1 + $0x6c0] sm:$0xff]
    %v245 = vld [vmem:[%s1 + $0x6c8] sm:$0xff]
    %v246 = vld [vmem:[%s1 + $0x6d0] sm:$0xff]
    %v247 = vld [vmem:[%s1 + $0x6d8] sm:$0xff]
    %v248 = vld [vmem:[%s1 + $0x6e0] sm:$0xff]
    %v249 = vld [vmem:[%s1 + $0x6e8] sm:$0xff]
    %v250 = vld [vmem:[%s1 + $0x6f0] sm:$0xff]
    %v251 = vld [vmem:[%s1 + $0x6f8] sm:$0xff]
    %v252 = vld [vmem:[%s1 + $0x700] sm:$0xff]
    %v253 = vld [vmem:[%s1 + $0x708] sm:$0xff]
    %v254 = vld [vmem:[%s1 + $0x710] sm:$0xff]
    %v255 = vld [vmem:[%s1 + $0x718] sm:$0xff]
    %v256 = vld [vmem:[%s1 + $0x720] sm:$0xff]
    %v257 = vld [vmem:[%s1 + $0x728] sm:$0xff]
    %v258 = vld [vmem:[%s1 + $0x730] sm:$0xff]
    %v259 = vld [vmem:[%s1 + $0x738] sm:$0xff]
    %v260 = vld [vmem:[%s1 + $0x740] sm:$0xff]
    %v261 = vld [vmem:[%s1 + $0x748] sm:$0xff]
    %v262 = vld [vmem:[%s1 + $0x750] sm:$0xff]
    %v263 = vld [vmem:[%s1 + $0x758] sm:$0xff]
    %v264 = vld [vmem:[%s1 + $0x760] sm:$0xff]
    %v265 = vld [vmem:[%s1 + $0x768] sm:$0xff]
    %v266 = vld [vmem:[%s1 + $0x770] sm:$0xff]
    %v267 = vld [vmem:[%s1 + $0x778] sm:$0xff]
    %v268 = vld [vmem:[%s1 + $0x780] sm:$0xff]
    %v269 = vld [vmem:[%s1 + $0x788] sm:$0xff]
    %v270 = vld [vmem:[%s1 + $0x790] sm:$0xff]
    %v271 = vld [vmem:[%s1 + $0x798] sm:$0xff]
    %v272 = vld [vmem:[%s1 + $0x7a0] sm:$0xff]
    %v273 = vld [vmem:[%s1 + $0x7a8] sm:$0xff]
    %v274 = vld [vmem:[%s1 + $0x7b0] sm:$0xff]
    %v275 = vld [vmem:[%s1 + $0x7b8] sm:$0xff]
    %v276 = vld [vmem:[%s1 + $0x7c0] sm:$0xff]
    %v277 = vld [vmem:[%s1 + $0x7c8] sm:$0xff]
    %v278 = vld [vmem:[%s1 + $0x7d0] sm:$0xff]
    %v279 = vld [vmem:[%s1 + $0x7d8] sm:$0xff]
    %v280 = vld [vmem:[%s1 + $0x7e0] sm:$0xff]
    %v281 = vld [vmem:[%s1 + $0x7e8] sm:$0xff]
    %v282 = vld [vmem:[%s1 + $0x7f0] sm:$0xff]
    %v283 = vld [vmem:[%s1 + $0x7f8] sm:$0xff]
    %v284 = vld [vmem:[%s1 + $0x800] sm:$0xff]
    %v285 = vld [vmem:[%s1 + $0x808] sm:$0xff]
    %v286 = vld [vmem:[%s1 + $0x810] sm:$0xff]
    %v287 = vld [vmem:[%s1 + $0x818] sm:$0xff]
    %v288 = vld [vmem:[%s1 + $0x820] sm:$0xff]
    %v289 = vld [vmem:[%s1 + $0x828] sm:$0xff]
    %v290 = vld [vmem:[%s1 + $0x830] sm:$0xff]
    %v291 = vld [vmem:[%s1 + $0x838] sm:$0xff]
    %v292 = vld [vmem:[%s1 + $0x840] sm:$0xff]
    %v293 = vld [vmem:[%s1 + $0x848] sm:$0xff]
    %v294 = vld [vmem:[%s1 + $0x850] sm:$0xff]
    %v295 = vld [vmem:[%s1 + $0x858] sm:$0xff]
    %v296 = vld [vmem:[%s1 + $0x860] sm:$0xff]
    %v297 = vld [vmem:[%s1 + $0x868] sm:$0xff]
    %v298 = vld [vmem:[%s1 + $0x870] sm:$0xff]
    %v299 = vld [vmem:[%s1 + $0x878] sm:$0xff]
    %v300 = vld [vmem:[%s1 + $0x880] sm:$0xff]
    %v301 = vld [vmem:[%s1 + $0x888] sm:$0xff]
    %v302 = vld [vmem:[%s1 + $0x890] sm:$0xff]
    %v303 = vld [vmem:[%s1 + $0x898] sm:$0xff]
    %v304 = vld [vmem:[%s1 + $0x8a0] sm:$0xff]
    %v305 = vld [vmem:[%s1 + $0x8a8] sm:$0xff]
    %v306 = vld [vmem:[%s1 + $0x8b0] sm:$0xff]
    %v307 = vld [vmem:[%s1 + $0x8b8] sm:$0xff]
    %v308 = vld [vmem:[%s1 + $0x8c0] sm:$0xff]
    %v309 = vld [vmem:[%s1 + $0x8c8] sm:$0xff]
    %v310 = vld [vmem:[%s1 + $0x8d0] sm:$0xff]
    %v311 = vld [vmem:[%s1 + $0x8d8] sm:$0xff]
    %v312 = vld [vmem:[%s1 + $0x8e0] sm:$0xff]
    %v313 = vld [vmem:[%s1 + $0x8e8] sm:$0xff]
    %v314 = vld [vmem:[%s1 + $0x8f0] sm:$0xff]
    %v315 = vld [vmem:[%s1 + $0x8f8] sm:$0xff]
    %v316 = vld [vmem:[%s1 + $0x900] sm:$0xff]
    %v317 = vld [vmem:[%s1 + $0x908] sm:$0xff]
    %v318 = vld [vmem:[%s1 + $0x910] sm:$0xff]
    %v319 = vld [vmem:[%s1 + $0x918] sm:$0xff]
    %v320 = vld [vmem:[%s1 + $0x920] sm:$0xff]
    %v321 = vld [vmem:[%s1 + $0x928] sm:$0xff]
    %v322 = vld [vmem:[%s1 + $0x930] sm:$0xff]
    %v323 = vld [vmem:[%s1 + $0x938] sm:$0xff]
    %v324 = vld [vmem:[%s1 + $0x940] sm:$0xff]
    %v325 = vld [vmem:[%s1 + $0x948] sm:$0xff]
    %v326 = vld [vmem:[%s1 + $0x950] sm:$0xff]
    %v327 = vld [vmem:[%s1 + $0x958] sm:$0xff]
    %v328 = vld [vmem:[%s1 + $0x960] sm:$0xff]
    %v329 = vld [vmem:[%s1 + $0x968] sm:$0xff]
    %v330 = vld [vmem:[%s1 + $0x970] sm:$0xff]
    %v331 = vld [vmem:[%s1 + $0x978] sm:$0xff]
    %v332 = vld [vmem:[%s1 + $0x980] sm:$0xff]
    %v333 = vld [vmem:[%s1 + $0x988] sm:$0xff]
    %v334 = vld [vmem:[%s1 + $0x990] sm:$0xff]
    %v335 = vld [vmem:[%s1 + $0x998] sm:$0xff]
    %v336 = vld [vmem:[%s1 + $0x9a0] sm:$0xff]
    %v337 = vld [vmem:[%s1 + $0x9a8] sm:$0xff]
    %v338 = vld [vmem:[%s1 + $0x9b0] sm:$0xff]
    %v339 = vld [vmem:[%s1 + $0x9b8] sm:$0xff]
    %v340 = vld [vmem:[%s1 + $0x9c0] sm:$0xff]
    %v341 = vld [vmem:[%s1 + $0x9c8] sm:$0xff]
    %v342 = vld [vmem:[%s1 + $0x9d0] sm:$0xff]
    %v343 = vld [vmem:[%s1 + $0x9d8] sm:$0xff]
    %v344 = vld [vmem:[%s1 + $0x9e0] sm:$0xff]
    %v345 = vld [vmem:[%s1 + $0x9e8] sm:$0xff]
    %v346 = vld [vmem:[%s1 + $0x9f0] sm:$0xff]
    %v347 = vld [vmem:[%s1 + $0x9f8] sm:$0xff]
    %v348 = vld [vmem:[%s1 + $0xa00] sm:$0xff]
    %v349 = vld [vmem:[%s1 + $0xa08] sm:$0xff]
    %v350 = vld [vmem:[%s1 + $0xa10] sm:$0xff]
    %v351 = vld [vmem:[%s1 + $0xa18] sm:$0xff]
    %v352 = vld [vmem:[%s1 + $0xa20] sm:$0xff]
    %v353 = vld [vmem:[%s1 + $0xa28] sm:$0xff]
    %v354 = vld [vmem:[%s1 + $0xa30] sm:$0xff]
    %v355 = vld [vmem:[%s1 + $0xa38] sm:$0xff]
    %v356 = vld [vmem:[%s1 + $0xa40] sm:$0xff]
    %v357 = vld [vmem:[%s1 + $0xa48] sm:$0xff]
    %v358 = vld [vmem:[%s1 + $0xa50] sm:$0xff]
    %v359 = vld [vmem:[%s1 + $0xa58] sm:$0xff]
    %v360 = vld [vmem:[%s1 + $0xa60] sm:$0xff]
    %v361 = vld [vmem:[%s1 + $0xa68] sm:$0xff]
    %v362 = vld [vmem:[%s1 + $0xa70] sm:$0xff]
    %v363 = vld [vmem:[%s1 + $0xa78] sm:$0xff]
    %v364 = vld [vmem:[%s1 + $0xa80] sm:$0xff]
    %v365 = vld [vmem:[%s1 + $0xa88] sm:$0xff]
    %v366 = vld [vmem:[%s1 + $0xa90] sm:$0xff]
    %v367 = vld [vmem:[%s1 + $0xa98] sm:$0xff]
    %v368 = vld [vmem:[%s1 + $0xaa0] sm:$0xff]
    %v369 = vld [vmem:[%s1 + $0xaa8] sm:$0xff]
    %v370 = vld [vmem:[%s1 + $0xab0] sm:$0xff]
    %v371 = vld [vmem:[%s1 + $0xab8] sm:$0xff]
    %v372 = vld [vmem:[%s1 + $0xac0] sm:$0xff]
    %v373 = vld [vmem:[%s1 + $0xac8] sm:$0xff]
    %v374 = vld [vmem:[%s1 + $0xad0] sm:$0xff]
    %v375 = vld [vmem:[%s1 + $0xad8] sm:$0xff]
    %v376 = vld [vmem:[%s1 + $0xae0] sm:$0xff]
    %v377 = vld [vmem:[%s1 + $0xae8] sm:$0xff]
    %v378 = vld [vmem:[%s1 + $0xaf0] sm:$0xff]
    %v379 = vld [vmem:[%s1 + $0xaf8] sm:$0xff]
    %v380 = vld [vmem:[%s1 + $0xb00] sm:$0xff]
    %v381 = vld [vmem:[%s1 + $0xb08] sm:$0xff]
    %v382 = vld [vmem:[%s1 + $0xb10] sm:$0xff]
    %v383 = vld [vmem:[%s1 + $0xb18] sm:$0xff]
    %v384 = vld [vmem:[%s1 + $0xb20] sm:$0xff]
    %v385 = vld [vmem:[%s1 + $0xb28] sm:$0xff]
    %v386 = vld [vmem:[%s1 + $0xb30] sm:$0xff]
    %v387 = vld [vmem:[%s1 + $0xb38] sm:$0xff]
    %v388 = vld [vmem:[%s1 + $0xb40] sm:$0xff]
    %v389 = vld [vmem:[%s1 + $0xb48] sm:$0xff]
    %v390 = vld [vmem:[%s1 + $0xb50] sm:$0xff]
    %v391 = vld [vmem:[%s1 + $0xb58] sm:$0xff]
    %v392 = vld [vmem:[%s1 + $0xb60] sm:$0xff]
    %v393 = vld [vmem:[%s1 + $0xb68] sm:$0xff]
    %v394 = vld [vmem:[%s1 + $0xb70] sm:$0xff]
    %v395 = vld [vmem:[%s1 + $0xb78] sm:$0xff]
    %v396 = vld [vmem:[%s1 + $0xb80] sm:$0xff]
    %v397 = vld [vmem:[%s1 + $0xb88] sm:$0xff]
    %v398 = vld [vmem:[%s1 + $0xb90] sm:$0xff]
    %v399 = vld [vmem:[%s1 + $0xb98] sm:$0xff]
    %v400 = vld [vmem:[%s1 + $0xba0] sm:$0xff]
    %v401 = vld [vmem:[%s1 + $0xba8] sm:$0xff]
    %v402 = vld [vmem:[%s1 + $0xbb0] sm:$0xff]
    %v403 = vld [vmem:[%s1 + $0xbb8] sm:$0xff]
    %v404 = vld [vmem:[%s1 + $0xbc0] sm:$0xff]
    %v405 = vld [vmem:[%s1 + $0xbc8] sm:$0xff]
    %v406 = vld [vmem:[%s1 + $0xbd0] sm:$0xff]
    %v407 = vld [vmem:[%s1 + $0xbd8] sm:$0xff]
    %v408 = vld [vmem:[%s1 + $0xbe0] sm:$0xff]
    %v409 = vld [vmem:[%s1 + $0xbe8] sm:$0xff]
    %v410 = vld [vmem:[%s1 + $0xbf0] sm:$0xff]
    %v411 = vld [vmem:[%s1 + $0xbf8] sm:$0xff]
    %v412 = vld [vmem:[%s1 + $0xc00] sm:$0xff]
    %v413 = vld [vmem:[%s1 + $0xc08] sm:$0xff]
    %v414 = vld [vmem:[%s1 + $0xc10] sm:$0xff]
    %v415 = vld [vmem:[%s1 + $0xc18] sm:$0xff]
    %v416 = vld [vmem:[%s1 + $0xc20] sm:$0xff]
    %v417 = vld [vmem:[%s1 + $0xc28] sm:$0xff]
    %v418 = vld [vmem:[%s1 + $0xc30] sm:$0xff]
    %v419 = vld [vmem:[%s1 + $0xc38] sm:$0xff]
    %v420 = vld [vmem:[%s2] sm:$0xf]
    %v422 = vperm.slane %v420, 0
    %v423 = vperm.slane %v420, 1
    %v424 = vperm.slane %v420, 2
    %v425 = vperm.slane %v420, 3
    %vm430 = vcmask 130048
    %v432 = vsel %vm430, %v27, 0
    %434 = vmatpush.msra.mxu0 %v88
    %435 = vmatpush.msra.mxu0 %v84
    %436 = vmatpush.msra.mxu0 %v80
    %437 = vmatpush.msra.mxu0 %v76
    %438 = vmatpush.msra.mxu0 %v72
    %439 = vmatpush.msra.mxu0 %v68
    %440 = vmatpush.msra.mxu0 %v64
    %441 = vmatpush.msra.mxu0 %v60
    %442 = vmatpush.msra.mxu0 %v56
    %443 = vmatpush.msra.mxu0 %v52
    %444 = vmatpush.msra.mxu0 %v48
    %445 = vmatpush.msra.mxu0 %v44
    %446 = vmatpush.msra.mxu0 %v40
    %447 = vmatpush.msra.mxu0 %v36
    %448 = vmatpush.msra.mxu0 %v32
    %449 = vmatpush.msra.mxu0 %v28
    %450 = vmatmul.f32.gmra.mxu0 %v21
    %v451 = vpop.f32.mrf.mxu0
    %v452 = vadd.f32 %v422, %v451
    %453 = vdwg.mxu0
    %454 = vmatpush.msra.mxu0 %v152
    %455 = vmatpush.msra.mxu0 %v148
    %456 = vmatpush.msra.mxu0 %v144
    %457 = vmatpush.msra.mxu0 %v140
    %458 = vmatpush.msra.mxu0 %v136
    %459 = vmatpush.msra.mxu0 %v132
    %460 = vmatpush.msra.mxu0 %v128
    %461 = vmatpush.msra.mxu0 %v124
    %462 = vmatpush.msra.mxu0 %v120
    %463 = vmatpush.msra.mxu0 %v116
    %464 = vmatpush.msra.mxu0 %v112
    %465 = vmatpush.msra.mxu0 %v108
    %466 = vmatpush.msra.mxu0 %v104
    %467 = vmatpush.msra.mxu0 %v100
    %468 = vmatpush.msra.mxu0 %v96
    %469 = vmatpush.msra.mxu0 %v92
    %470 = vmatmul.f32.gmra.mxu0 %v22
    %v471 = vpop.f32.mrf.mxu0
    %v472 = vadd.f32 %v452, %v471
    %473 = vdwg.mxu0
    %474 = vmatpush.msra.mxu0 %v216
    %475 = vmatpush.msra.mxu0 %v212
    %476 = vmatpush.msra.mxu0 %v208
    %477 = vmatpush.msra.mxu0 %v204
    %478 = vmatpush.msra.mxu0 %v200
    %479 = vmatpush.msra.mxu0 %v196
    %480 = vmatpush.msra.mxu0 %v192
    %481 = vmatpush.msra.mxu0 %v188
    %482 = vmatpush.msra.mxu0 %v184
    %483 = vmatpush.msra.mxu0 %v180
    %484 = vmatpush.msra.mxu0 %v176
    %485 = vmatpush.msra.mxu0 %v172
    %486 = vmatpush.msra.mxu0 %v168
    %487 = vmatpush.msra.mxu0 %v164
    %488 = vmatpush.msra.mxu0 %v160
    %489 = vmatpush.msra.mxu0 %v156
    %490 = vmatmul.f32.gmra.mxu0 %v23
    %v491 = vpop.f32.mrf.mxu0
    %v492 = vadd.f32 %v472, %v491
    %493 = vdwg.mxu0
    %494 = vmatpush.msra.mxu0 %v280
    %495 = vmatpush.msra.mxu0 %v276
    %496 = vmatpush.msra.mxu0 %v272
    %497 = vmatpush.msra.mxu0 %v268
    %498 = vmatpush.msra.mxu0 %v264
    %499 = vmatpush.msra.mxu0 %v260
    %500 = vmatpush.msra.mxu0 %v256
    %501 = vmatpush.msra.mxu0 %v252
    %502 = vmatpush.msra.mxu0 %v248
    %503 = vmatpush.msra.mxu0 %v244
    %504 = vmatpush.msra.mxu0 %v240
    %505 = vmatpush.msra.mxu0 %v236
    %506 = vmatpush.msra.mxu0 %v232
    %507 = vmatpush.msra.mxu0 %v228
    %508 = vmatpush.msra.mxu0 %v224
    %509 = vmatpush.msra.mxu0 %v220
    %510 = vmatmul.f32.gmra.mxu0 %v24
    %v511 = vpop.f32.mrf.mxu0
    %v512 = vadd.f32 %v492, %v511
    %513 = vdwg.mxu0
    %514 = vmatpush.msra.mxu0 %v344
    %515 = vmatpush.msra.mxu0 %v340
    %516 = vmatpush.msra.mxu0 %v336
    %517 = vmatpush.msra.mxu0 %v332
    %518 = vmatpush.msra.mxu0 %v328
    %519 = vmatpush.msra.mxu0 %v324
    %520 = vmatpush.msra.mxu0 %v320
    %521 = vmatpush.msra.mxu0 %v316
    %522 = vmatpush.msra.mxu0 %v312
    %523 = vmatpush.msra.mxu0 %v308
    %524 = vmatpush.msra.mxu0 %v304
    %525 = vmatpush.msra.mxu0 %v300
    %526 = vmatpush.msra.mxu0 %v296
    %527 = vmatpush.msra.mxu0 %v292
    %528 = vmatpush.msra.mxu0 %v288
    %529 = vmatpush.msra.mxu0 %v284
    %530 = vmatmul.f32.gmra.mxu0 %v25
    %v531 = vpop.f32.mrf.mxu0
    %v532 = vadd.f32 %v512, %v531
    %533 = vdwg.mxu0
    %534 = vmatpush.msra.mxu0 %v408
    %535 = vmatpush.msra.mxu0 %v404
    %536 = vmatpush.msra.mxu0 %v400
    %537 = vmatpush.msra.mxu0 %v396
    %538 = vmatpush.msra.mxu0 %v392
    %539 = vmatpush.msra.mxu0 %v388
    %540 = vmatpush.msra.mxu0 %v384
    %541 = vmatpush.msra.mxu0 %v380
    %542 = vmatpush.msra.mxu0 %v376
    %543 = vmatpush.msra.mxu0 %v372
    %544 = vmatpush.msra.mxu0 %v368
    %545 = vmatpush.msra.mxu0 %v364
    %546 = vmatpush.msra.mxu0 %v360
    %547 = vmatpush.msra.mxu0 %v356
    %548 = vmatpush.msra.mxu0 %v352
    %549 = vmatpush.msra.mxu0 %v348
    %550 = vmatmul.f32.gmra.mxu0 %v26
    %v551 = vpop.f32.mrf.mxu0
    %v552 = vadd.f32 %v532, %v551
    %553 = vdwg.mxu0
    %554 = vmatpush.msra.mxu0 0.0
    %555 = vmatpush.msra.mxu0 0.0
    %556 = vmatpush.msra.mxu0 0.0
    %557 = vmatpush.msra.mxu0 0.0
    %558 = vmatpush.msra.mxu0 0.0
    %559 = vmatpush.msra.mxu0 0.0
    %560 = vmatpush.msra.mxu0 0.0
    %561 = vmatpush.msra.mxu0 0.0
    %562 = vmatpush.msra.mxu0 0.0
    %563 = vmatpush.msra.mxu0 0.0
    %564 = vmatpush.msra.mxu0 0.0
    %565 = vmatpush.msra.mxu0 0.0
    %566 = vmatpush.msra.mxu0 0.0
    %567 = vmatpush.msra.mxu0 0.0
    %568 = vmatpush.msra.mxu0 %v416
    %569 = vmatpush.msra.mxu0 %v412
    %570 = vmatmul.f32.gmra.mxu0 %v432
    %v571 = vpop.f32.mrf.mxu0
    %v572 = vadd.f32 %v552, %v571
    %573 = vdwg.mxu0
    %574 = vmatpush.msra.mxu0 %v89
    %575 = vmatpush.msra.mxu0 %v85
    %576 = vmatpush.msra.mxu0 %v81
    %577 = vmatpush.msra.mxu0 %v77
    %578 = vmatpush.msra.mxu0 %v73
    %579 = vmatpush.msra.mxu0 %v69
    %580 = vmatpush.msra.mxu0 %v65
    %581 = vmatpush.msra.mxu0 %v61
    %582 = vmatpush.msra.mxu0 %v57
    %583 = vmatpush.msra.mxu0 %v53
    %584 = vmatpush.msra.mxu0 %v49
    %585 = vmatpush.msra.mxu0 %v45
    %586 = vmatpush.msra.mxu0 %v41
    %587 = vmatpush.msra.mxu0 %v37
    %588 = vmatpush.msra.mxu0 %v33
    %589 = vmatpush.msra.mxu0 %v29
    %590 = vmatmul.f32.gmra.mxu0 %v21
    %v591 = vpop.f32.mrf.mxu0
    %v592 = vadd.f32 %v423, %v591
    %593 = vdwg.mxu0
    %594 = vmatpush.msra.mxu0 %v153
    %595 = vmatpush.msra.mxu0 %v149
    %596 = vmatpush.msra.mxu0 %v145
    %597 = vmatpush.msra.mxu0 %v141
    %598 = vmatpush.msra.mxu0 %v137
    %599 = vmatpush.msra.mxu0 %v133
    %600 = vmatpush.msra.mxu0 %v129
    %601 = vmatpush.msra.mxu0 %v125
    %602 = vmatpush.msra.mxu0 %v121
    %603 = vmatpush.msra.mxu0 %v117
    %604 = vmatpush.msra.mxu0 %v113
    %605 = vmatpush.msra.mxu0 %v109
    %606 = vmatpush.msra.mxu0 %v105
    %607 = vmatpush.msra.mxu0 %v101
    %608 = vmatpush.msra.mxu0 %v97
    %609 = vmatpush.msra.mxu0 %v93
    %610 = vmatmul.f32.gmra.mxu0 %v22
    %v611 = vpop.f32.mrf.mxu0
    %v612 = vadd.f32 %v592, %v611
    %613 = vdwg.mxu0
    %614 = vmatpush.msra.mxu0 %v217
    %615 = vmatpush.msra.mxu0 %v213
    %616 = vmatpush.msra.mxu0 %v209
    %617 = vmatpush.msra.mxu0 %v205
    %618 = vmatpush.msra.mxu0 %v201
    %619 = vmatpush.msra.mxu0 %v197
    %620 = vmatpush.msra.mxu0 %v193
    %621 = vmatpush.msra.mxu0 %v189
    %622 = vmatpush.msra.mxu0 %v185
    %623 = vmatpush.msra.mxu0 %v181
    %624 = vmatpush.msra.mxu0 %v177
    %625 = vmatpush.msra.mxu0 %v173
    %626 = vmatpush.msra.mxu0 %v169
    %627 = vmatpush.msra.mxu0 %v165
    %628 = vmatpush.msra.mxu0 %v161
    %629 = vmatpush.msra.mxu0 %v157
    %630 = vmatmul.f32.gmra.mxu0 %v23
    %v631 = vpop.f32.mrf.mxu0
    %v632 = vadd.f32 %v612, %v631
    %633 = vdwg.mxu0
    %634 = vmatpush.msra.mxu0 %v281
    %635 = vmatpush.msra.mxu0 %v277
    %636 = vmatpush.msra.mxu0 %v273
    %637 = vmatpush.msra.mxu0 %v269
    %638 = vmatpush.msra.mxu0 %v265
    %639 = vmatpush.msra.mxu0 %v261
    %640 = vmatpush.msra.mxu0 %v257
    %641 = vmatpush.msra.mxu0 %v253
    %642 = vmatpush.msra.mxu0 %v249
    %643 = vmatpush.msra.mxu0 %v245
    %644 = vmatpush.msra.mxu0 %v241
    %645 = vmatpush.msra.mxu0 %v237
    %646 = vmatpush.msra.mxu0 %v233
    %647 = vmatpush.msra.mxu0 %v229
    %648 = vmatpush.msra.mxu0 %v225
    %649 = vmatpush.msra.mxu0 %v221
    %650 = vmatmul.f32.gmra.mxu0 %v24
    %v651 = vpop.f32.mrf.mxu0
    %v652 = vadd.f32 %v632, %v651
    %653 = vdwg.mxu0
    %654 = vmatpush.msra.mxu0 %v345
    %655 = vmatpush.msra.mxu0 %v341
    %656 = vmatpush.msra.mxu0 %v337
    %657 = vmatpush.msra.mxu0 %v333
    %658 = vmatpush.msra.mxu0 %v329
    %659 = vmatpush.msra.mxu0 %v325
    %660 = vmatpush.msra.mxu0 %v321
    %661 = vmatpush.msra.mxu0 %v317
    %662 = vmatpush.msra.mxu0 %v313
    %663 = vmatpush.msra.mxu0 %v309
    %664 = vmatpush.msra.mxu0 %v305
    %665 = vmatpush.msra.mxu0 %v301
    %666 = vmatpush.msra.mxu0 %v297
    %667 = vmatpush.msra.mxu0 %v293
    %668 = vmatpush.msra.mxu0 %v289
    %669 = vmatpush.msra.mxu0 %v285
    %670 = vmatmul.f32.gmra.mxu0 %v25
    %v671 = vpop.f32.mrf.mxu0
    %v672 = vadd.f32 %v652, %v671
    %673 = vdwg.mxu0
    %674 = vmatpush.msra.mxu0 %v409
    %675 = vmatpush.msra.mxu0 %v405
    %676 = vmatpush.msra.mxu0 %v401
    %677 = vmatpush.msra.mxu0 %v397
    %678 = vmatpush.msra.mxu0 %v393
    %679 = vmatpush.msra.mxu0 %v389
    %680 = vmatpush.msra.mxu0 %v385
    %681 = vmatpush.msra.mxu0 %v381
    %682 = vmatpush.msra.mxu0 %v377
    %683 = vmatpush.msra.mxu0 %v373
    %684 = vmatpush.msra.mxu0 %v369
    %685 = vmatpush.msra.mxu0 %v365
    %686 = vmatpush.msra.mxu0 %v361
    %687 = vmatpush.msra.mxu0 %v357
    %688 = vmatpush.msra.mxu0 %v353
    %689 = vmatpush.msra.mxu0 %v349
    %690 = vmatmul.f32.gmra.mxu0 %v26
    %v691 = vpop.f32.mrf.mxu0
    %v692 = vadd.f32 %v672, %v691
    %693 = vdwg.mxu0
    %694 = vmatpush.msra.mxu0 0.0
    %695 = vmatpush.msra.mxu0 0.0
    %696 = vmatpush.msra.mxu0 0.0
    %697 = vmatpush.msra.mxu0 0.0
    %698 = vmatpush.msra.mxu0 0.0
    %699 = vmatpush.msra.mxu0 0.0
    %700 = vmatpush.msra.mxu0 0.0
    %701 = vmatpush.msra.mxu0 0.0
    %702 = vmatpush.msra.mxu0 0.0
    %703 = vmatpush.msra.mxu0 0.0
    %704 = vmatpush.msra.mxu0 0.0
    %705 = vmatpush.msra.mxu0 0.0
    %706 = vmatpush.msra.mxu0 0.0
    %707 = vmatpush.msra.mxu0 0.0
    %708 = vmatpush.msra.mxu0 %v417
    %709 = vmatpush.msra.mxu0 %v413
    %710 = vmatmul.f32.gmra.mxu0 %v432
    %v711 = vpop.f32.mrf.mxu0
    %v712 = vadd.f32 %v692, %v711
    %713 = vdwg.mxu0
    %714 = vmatpush.msra.mxu0 %v90
    %715 = vmatpush.msra.mxu0 %v86
    %716 = vmatpush.msra.mxu0 %v82
    %717 = vmatpush.msra.mxu0 %v78
    %718 = vmatpush.msra.mxu0 %v74
    %719 = vmatpush.msra.mxu0 %v70
    %720 = vmatpush.msra.mxu0 %v66
    %721 = vmatpush.msra.mxu0 %v62
    %722 = vmatpush.msra.mxu0 %v58
    %723 = vmatpush.msra.mxu0 %v54
    %724 = vmatpush.msra.mxu0 %v50
    %725 = vmatpush.msra.mxu0 %v46
    %726 = vmatpush.msra.mxu0 %v42
    %727 = vmatpush.msra.mxu0 %v38
    %728 = vmatpush.msra.mxu0 %v34
    %729 = vmatpush.msra.mxu0 %v30
    %730 = vmatmul.f32.gmra.mxu0 %v21
    %v731 = vpop.f32.mrf.mxu0
    %v732 = vadd.f32 %v424, %v731
    %733 = vdwg.mxu0
    %734 = vmatpush.msra.mxu0 %v154
    %735 = vmatpush.msra.mxu0 %v150
    %736 = vmatpush.msra.mxu0 %v146
    %737 = vmatpush.msra.mxu0 %v142
    %738 = vmatpush.msra.mxu0 %v138
    %739 = vmatpush.msra.mxu0 %v134
    %740 = vmatpush.msra.mxu0 %v130
    %741 = vmatpush.msra.mxu0 %v126
    %742 = vmatpush.msra.mxu0 %v122
    %743 = vmatpush.msra.mxu0 %v118
    %744 = vmatpush.msra.mxu0 %v114
    %745 = vmatpush.msra.mxu0 %v110
    %746 = vmatpush.msra.mxu0 %v106
    %747 = vmatpush.msra.mxu0 %v102
    %748 = vmatpush.msra.mxu0 %v98
    %749 = vmatpush.msra.mxu0 %v94
    %750 = vmatmul.f32.gmra.mxu0 %v22
    %v751 = vpop.f32.mrf.mxu0
    %v752 = vadd.f32 %v732, %v751
    %753 = vdwg.mxu0
    %754 = vmatpush.msra.mxu0 %v218
    %755 = vmatpush.msra.mxu0 %v214
    %756 = vmatpush.msra.mxu0 %v210
    %757 = vmatpush.msra.mxu0 %v206
    %758 = vmatpush.msra.mxu0 %v202
    %759 = vmatpush.msra.mxu0 %v198
    %760 = vmatpush.msra.mxu0 %v194
    %761 = vmatpush.msra.mxu0 %v190
    %762 = vmatpush.msra.mxu0 %v186
    %763 = vmatpush.msra.mxu0 %v182
    %764 = vmatpush.msra.mxu0 %v178
    %765 = vmatpush.msra.mxu0 %v174
    %766 = vmatpush.msra.mxu0 %v170
    %767 = vmatpush.msra.mxu0 %v166
    %768 = vmatpush.msra.mxu0 %v162
    %769 = vmatpush.msra.mxu0 %v158
    %770 = vmatmul.f32.gmra.mxu0 %v23
    %v771 = vpop.f32.mrf.mxu0
    %v772 = vadd.f32 %v752, %v771
    %773 = vdwg.mxu0
    %774 = vmatpush.msra.mxu0 %v282
    %775 = vmatpush.msra.mxu0 %v278
    %776 = vmatpush.msra.mxu0 %v274
    %777 = vmatpush.msra.mxu0 %v270
    %778 = vmatpush.msra.mxu0 %v266
    %779 = vmatpush.msra.mxu0 %v262
    %780 = vmatpush.msra.mxu0 %v258
    %781 = vmatpush.msra.mxu0 %v254
    %782 = vmatpush.msra.mxu0 %v250
    %783 = vmatpush.msra.mxu0 %v246
    %784 = vmatpush.msra.mxu0 %v242
    %785 = vmatpush.msra.mxu0 %v238
    %786 = vmatpush.msra.mxu0 %v234
    %787 = vmatpush.msra.mxu0 %v230
    %788 = vmatpush.msra.mxu0 %v226
    %789 = vmatpush.msra.mxu0 %v222
    %790 = vmatmul.f32.gmra.mxu0 %v24
    %v791 = vpop.f32.mrf.mxu0
    %v792 = vadd.f32 %v772, %v791
    %793 = vdwg.mxu0
    %794 = vmatpush.msra.mxu0 %v346
    %795 = vmatpush.msra.mxu0 %v342
    %796 = vmatpush.msra.mxu0 %v338
    %797 = vmatpush.msra.mxu0 %v334
    %798 = vmatpush.msra.mxu0 %v330
    %799 = vmatpush.msra.mxu0 %v326
    %800 = vmatpush.msra.mxu0 %v322
    %801 = vmatpush.msra.mxu0 %v318
    %802 = vmatpush.msra.mxu0 %v314
    %803 = vmatpush.msra.mxu0 %v310
    %804 = vmatpush.msra.mxu0 %v306
    %805 = vmatpush.msra.mxu0 %v302
    %806 = vmatpush.msra.mxu0 %v298
    %807 = vmatpush.msra.mxu0 %v294
    %808 = vmatpush.msra.mxu0 %v290
    %809 = vmatpush.msra.mxu0 %v286
    %810 = vmatmul.f32.gmra.mxu0 %v25
    %v811 = vpop.f32.mrf.mxu0
    %v812 = vadd.f32 %v792, %v811
    %813 = vdwg.mxu0
    %814 = vmatpush.msra.mxu0 %v410
    %815 = vmatpush.msra.mxu0 %v406
    %816 = vmatpush.msra.mxu0 %v402
    %817 = vmatpush.msra.mxu0 %v398
    %818 = vmatpush.msra.mxu0 %v394
    %819 = vmatpush.msra.mxu0 %v390
    %820 = vmatpush.msra.mxu0 %v386
    %821 = vmatpush.msra.mxu0 %v382
    %822 = vmatpush.msra.mxu0 %v378
    %823 = vmatpush.msra.mxu0 %v374
    %824 = vmatpush.msra.mxu0 %v370
    %825 = vmatpush.msra.mxu0 %v366
    %826 = vmatpush.msra.mxu0 %v362
    %827 = vmatpush.msra.mxu0 %v358
    %828 = vmatpush.msra.mxu0 %v354
    %829 = vmatpush.msra.mxu0 %v350
    %830 = vmatmul.f32.gmra.mxu0 %v26
    %v831 = vpop.f32.mrf.mxu0
    %v832 = vadd.f32 %v812, %v831
    %833 = vdwg.mxu0
    %834 = vmatpush.msra.mxu0 0.0
    %835 = vmatpush.msra.mxu0 0.0
    %836 = vmatpush.msra.mxu0 0.0
    %837 = vmatpush.msra.mxu0 0.0
    %838 = vmatpush.msra.mxu0 0.0
    %839 = vmatpush.msra.mxu0 0.0
    %840 = vmatpush.msra.mxu0 0.0
    %841 = vmatpush.msra.mxu0 0.0
    %842 = vmatpush.msra.mxu0 0.0
    %843 = vmatpush.msra.mxu0 0.0
    %844 = vmatpush.msra.mxu0 0.0
    %845 = vmatpush.msra.mxu0 0.0
    %846 = vmatpush.msra.mxu0 0.0
    %847 = vmatpush.msra.mxu0 0.0
    %848 = vmatpush.msra.mxu0 %v418
    %849 = vmatpush.msra.mxu0 %v414
    %850 = vmatmul.f32.gmra.mxu0 %v432
    %v851 = vpop.f32.mrf.mxu0
    %v852 = vadd.f32 %v832, %v851
    %853 = vdwg.mxu0
    %854 = vmatpush.msra.mxu0 %v91
    %855 = vmatpush.msra.mxu0 %v87
    %856 = vmatpush.msra.mxu0 %v83
    %857 = vmatpush.msra.mxu0 %v79
    %858 = vmatpush.msra.mxu0 %v75
    %859 = vmatpush.msra.mxu0 %v71
    %860 = vmatpush.msra.mxu0 %v67
    %861 = vmatpush.msra.mxu0 %v63
    %862 = vmatpush.msra.mxu0 %v59
    %863 = vmatpush.msra.mxu0 %v55
    %864 = vmatpush.msra.mxu0 %v51
    %865 = vmatpush.msra.mxu0 %v47
    %866 = vmatpush.msra.mxu0 %v43
    %867 = vmatpush.msra.mxu0 %v39
    %868 = vmatpush.msra.mxu0 %v35
    %869 = vmatpush.msra.mxu0 %v31
    %870 = vmatmul.f32.gmra.mxu0 %v21
    %v871 = vpop.f32.mrf.mxu0
    %v872 = vadd.f32 %v425, %v871
    %873 = vdwg.mxu0
    %874 = vmatpush.msra.mxu0 %v155
    %875 = vmatpush.msra.mxu0 %v151
    %876 = vmatpush.msra.mxu0 %v147
    %877 = vmatpush.msra.mxu0 %v143
    %878 = vmatpush.msra.mxu0 %v139
    %879 = vmatpush.msra.mxu0 %v135
    %880 = vmatpush.msra.mxu0 %v131
    %881 = vmatpush.msra.mxu0 %v127
    %882 = vmatpush.msra.mxu0 %v123
    %883 = vmatpush.msra.mxu0 %v119
    %884 = vmatpush.msra.mxu0 %v115
    %885 = vmatpush.msra.mxu0 %v111
    %886 = vmatpush.msra.mxu0 %v107
    %887 = vmatpush.msra.mxu0 %v103
    %888 = vmatpush.msra.mxu0 %v99
    %889 = vmatpush.msra.mxu0 %v95
    %890 = vmatmul.f32.gmra.mxu0 %v22
    %v891 = vpop.f32.mrf.mxu0
    %v892 = vadd.f32 %v872, %v891
    %893 = vdwg.mxu0
    %894 = vmatpush.msra.mxu0 %v219
    %895 = vmatpush.msra.mxu0 %v215
    %896 = vmatpush.msra.mxu0 %v211
    %897 = vmatpush.msra.mxu0 %v207
    %898 = vmatpush.msra.mxu0 %v203
    %899 = vmatpush.msra.mxu0 %v199
    %900 = vmatpush.msra.mxu0 %v195
    %901 = vmatpush.msra.mxu0 %v191
    %902 = vmatpush.msra.mxu0 %v187
    %903 = vmatpush.msra.mxu0 %v183
    %904 = vmatpush.msra.mxu0 %v179
    %905 = vmatpush.msra.mxu0 %v175
    %906 = vmatpush.msra.mxu0 %v171
    %907 = vmatpush.msra.mxu0 %v167
    %908 = vmatpush.msra.mxu0 %v163
    %909 = vmatpush.msra.mxu0 %v159
    %910 = vmatmul.f32.gmra.mxu0 %v23
    %v911 = vpop.f32.mrf.mxu0
    %v912 = vadd.f32 %v892, %v911
    %913 = vdwg.mxu0
    %914 = vmatpush.msra.mxu0 %v283
    %915 = vmatpush.msra.mxu0 %v279
    %916 = vmatpush.msra.mxu0 %v275
    %917 = vmatpush.msra.mxu0 %v271
    %918 = vmatpush.msra.mxu0 %v267
    %919 = vmatpush.msra.mxu0 %v263
    %920 = vmatpush.msra.mxu0 %v259
    %921 = vmatpush.msra.mxu0 %v255
    %922 = vmatpush.msra.mxu0 %v251
    %923 = vmatpush.msra.mxu0 %v247
    %924 = vmatpush.msra.mxu0 %v243
    %925 = vmatpush.msra.mxu0 %v239
    %926 = vmatpush.msra.mxu0 %v235
    %927 = vmatpush.msra.mxu0 %v231
    %928 = vmatpush.msra.mxu0 %v227
    %929 = vmatpush.msra.mxu0 %v223
    %930 = vmatmul.f32.gmra.mxu0 %v24
    %v931 = vpop.f32.mrf.mxu0
    %v932 = vadd.f32 %v912, %v931
    %933 = vdwg.mxu0
    %934 = vmatpush.msra.mxu0 %v347
    %935 = vmatpush.msra.mxu0 %v343
    %936 = vmatpush.msra.mxu0 %v339
    %937 = vmatpush.msra.mxu0 %v335
    %938 = vmatpush.msra.mxu0 %v331
    %939 = vmatpush.msra.mxu0 %v327
    %940 = vmatpush.msra.mxu0 %v323
    %941 = vmatpush.msra.mxu0 %v319
    %942 = vmatpush.msra.mxu0 %v315
    %943 = vmatpush.msra.mxu0 %v311
    %944 = vmatpush.msra.mxu0 %v307
    %945 = vmatpush.msra.mxu0 %v303
    %946 = vmatpush.msra.mxu0 %v299
    %947 = vmatpush.msra.mxu0 %v295
    %948 = vmatpush.msra.mxu0 %v291
    %949 = vmatpush.msra.mxu0 %v287
    %950 = vmatmul.f32.gmra.mxu0 %v25
    %v951 = vpop.f32.mrf.mxu0
    %v952 = vadd.f32 %v932, %v951
    %953 = vdwg.mxu0
    %954 = vmatpush.msra.mxu0 %v411
    %955 = vmatpush.msra.mxu0 %v407
    %956 = vmatpush.msra.mxu0 %v403
    %957 = vmatpush.msra.mxu0 %v399
    %958 = vmatpush.msra.mxu0 %v395
    %959 = vmatpush.msra.mxu0 %v391
    %960 = vmatpush.msra.mxu0 %v387
    %961 = vmatpush.msra.mxu0 %v383
    %962 = vmatpush.msra.mxu0 %v379
    %963 = vmatpush.msra.mxu0 %v375
    %964 = vmatpush.msra.mxu0 %v371
    %965 = vmatpush.msra.mxu0 %v367
    %966 = vmatpush.msra.mxu0 %v363
    %967 = vmatpush.msra.mxu0 %v359
    %968 = vmatpush.msra.mxu0 %v355
    %969 = vmatpush.msra.mxu0 %v351
    %970 = vmatmul.f32.gmra.mxu0 %v26
    %v971 = vpop.f32.mrf.mxu0
    %v972 = vadd.f32 %v952, %v971
    %973 = vdwg.mxu0
    %974 = vmatpush.msra.mxu0 0.0
    %975 = vmatpush.msra.mxu0 0.0
    %976 = vmatpush.msra.mxu0 0.0
    %977 = vmatpush.msra.mxu0 0.0
    %978 = vmatpush.msra.mxu0 0.0
    %979 = vmatpush.msra.mxu0 0.0
    %980 = vmatpush.msra.mxu0 0.0
    %981 = vmatpush.msra.mxu0 0.0
    %982 = vmatpush.msra.mxu0 0.0
    %983 = vmatpush.msra.mxu0 0.0
    %984 = vmatpush.msra.mxu0 0.0
    %985 = vmatpush.msra.mxu0 0.0
    %986 = vmatpush.msra.mxu0 0.0
    %987 = vmatpush.msra.mxu0 0.0
    %988 = vmatpush.msra.mxu0 %v419
    %989 = vmatpush.msra.mxu0 %v415
    %990 = vmatmul.f32.gmra.mxu0 %v432
    %v991 = vpop.f32.mrf.mxu0
    %v992 = vadd.f32 %v972, %v991
    %993 = vdwg.mxu0
    %v994 = vmax.f32 %v572, 0.0
    %v995 = vmax.f32 %v712, 0.0
    %v996 = vmax.f32 %v852, 0.0
    %v997 = vmax.f32 %v992, 0.0
    %v998 = vld [vmem:[%s3] sm:$0xff]
    %v999 = vld [vmem:[%s3 + $0x8] sm:$0xff]
    %v1000 = vld [vmem:[%s3 + $0x10] sm:$0xff]
    %v1001 = vld [vmem:[%s3 + $0x18] sm:$0xff]
    %v1002 = vld [vmem:[%s3 + $0x20] sm:$0xff]
    %v1003 = vld [vmem:[%s3 + $0x28] sm:$0xff]
    %v1004 = vld [vmem:[%s3 + $0x30] sm:$0xff]
    %v1005 = vld [vmem:[%s3 + $0x38] sm:$0xff]
    %v1006 = vld [vmem:[%s3 + $0x40] sm:$0xff]
    %v1007 = vld [vmem:[%s3 + $0x48] sm:$0xff]
    %v1008 = vld [vmem:[%s3 + $0x50] sm:$0xff]
    %v1009 = vld [vmem:[%s3 + $0x58] sm:$0xff]
    %v1010 = vld [vmem:[%s3 + $0x60] sm:$0xff]
    %v1011 = vld [vmem:[%s3 + $0x68] sm:$0xff]
    %v1012 = vld [vmem:[%s3 + $0x70] sm:$0xff]
    %v1013 = vld [vmem:[%s3 + $0x78] sm:$0xff]
    %v1014 = vld [vmem:[%s3 + $0x80] sm:$0xff]
    %v1015 = vld [vmem:[%s3 + $0x88] sm:$0xff]
    %v1016 = vld [vmem:[%s3 + $0x90] sm:$0xff]
    %v1017 = vld [vmem:[%s3 + $0x98] sm:$0xff]
    %v1018 = vld [vmem:[%s3 + $0xa0] sm:$0xff]
    %v1019 = vld [vmem:[%s3 + $0xa8] sm:$0xff]
    %v1020 = vld [vmem:[%s3 + $0xb0] sm:$0xff]
    %v1021 = vld [vmem:[%s3 + $0xb8] sm:$0xff]
    %v1022 = vld [vmem:[%s3 + $0xc0] sm:$0xff]
    %v1023 = vld [vmem:[%s3 + $0xc8] sm:$0xff]
    %v1024 = vld [vmem:[%s3 + $0xd0] sm:$0xff]
    %v1025 = vld [vmem:[%s3 + $0xd8] sm:$0xff]
    %v1026 = vld [vmem:[%s3 + $0xe0] sm:$0xff]
    %v1027 = vld [vmem:[%s3 + $0xe8] sm:$0xff]
    %v1028 = vld [vmem:[%s3 + $0xf0] sm:$0xff]
    %v1029 = vld [vmem:[%s3 + $0xf8] sm:$0xff]
    %v1030 = vld [vmem:[%s3 + $0x100] sm:$0xff]
    %v1031 = vld [vmem:[%s3 + $0x108] sm:$0xff]
    %v1032 = vld [vmem:[%s3 + $0x110] sm:$0xff]
    %v1033 = vld [vmem:[%s3 + $0x118] sm:$0xff]
    %v1034 = vld [vmem:[%s3 + $0x120] sm:$0xff]
    %v1035 = vld [vmem:[%s3 + $0x128] sm:$0xff]
    %v1036 = vld [vmem:[%s3 + $0x130] sm:$0xff]
    %v1037 = vld [vmem:[%s3 + $0x138] sm:$0xff]
    %v1038 = vld [vmem:[%s3 + $0x140] sm:$0xff]
    %v1039 = vld [vmem:[%s3 + $0x148] sm:$0xff]
    %v1040 = vld [vmem:[%s3 + $0x150] sm:$0xff]
    %v1041 = vld [vmem:[%s3 + $0x158] sm:$0xff]
    %v1042 = vld [vmem:[%s3 + $0x160] sm:$0xff]
    %v1043 = vld [vmem:[%s3 + $0x168] sm:$0xff]
    %v1044 = vld [vmem:[%s3 + $0x170] sm:$0xff]
    %v1045 = vld [vmem:[%s3 + $0x178] sm:$0xff]
    %v1046 = vld [vmem:[%s3 + $0x180] sm:$0xff]
    %v1047 = vld [vmem:[%s3 + $0x188] sm:$0xff]
    %v1048 = vld [vmem:[%s3 + $0x190] sm:$0xff]
    %v1049 = vld [vmem:[%s3 + $0x198] sm:$0xff]
    %v1050 = vld [vmem:[%s3 + $0x1a0] sm:$0xff]
    %v1051 = vld [vmem:[%s3 + $0x1a8] sm:$0xff]
    %v1052 = vld [vmem:[%s3 + $0x1b0] sm:$0xff]
    %v1053 = vld [vmem:[%s3 + $0x1b8] sm:$0xff]
    %v1054 = vld [vmem:[%s3 + $0x1c0] sm:$0xff]
    %v1055 = vld [vmem:[%s3 + $0x1c8] sm:$0xff]
    %v1056 = vld [vmem:[%s3 + $0x1d0] sm:$0xff]
    %v1057 = vld [vmem:[%s3 + $0x1d8] sm:$0xff]
    %v1058 = vld [vmem:[%s3 + $0x1e0] sm:$0xff]
    %v1059 = vld [vmem:[%s3 + $0x1e8] sm:$0xff]
    %v1060 = vld [vmem:[%s3 + $0x1f0] sm:$0xff]
    %v1061 = vld [vmem:[%s3 + $0x1f8] sm:$0xff]
    %v1062 = vld [vmem:[%s4] sm:$0x1]
    %v1064 = vperm.slane %v1062, 0
    %1066 = vmatpush.msra.mxu0 %v1013
    %1067 = vmatpush.msra.mxu0 %v1012
    %1068 = vmatpush.msra.mxu0 %v1011
    %1069 = vmatpush.msra.mxu0 %v1010
    %1070 = vmatpush.msra.mxu0 %v1009
    %1071 = vmatpush.msra.mxu0 %v1008
    %1072 = vmatpush.msra.mxu0 %v1007
    %1073 = vmatpush.msra.mxu0 %v1006
    %1074 = vmatpush.msra.mxu0 %v1005
    %1075 = vmatpush.msra.mxu0 %v1004
    %1076 = vmatpush.msra.mxu0 %v1003
    %1077 = vmatpush.msra.mxu0 %v1002
    %1078 = vmatpush.msra.mxu0 %v1001
    %1079 = vmatpush.msra.mxu0 %v1000
    %1080 = vmatpush.msra.mxu0 %v999
    %1081 = vmatpush.msra.mxu0 %v998
    %1082 = vmatmul.f32.gmra.mxu0 %v994
    %v1083 = vpop.f32.mrf.mxu0
    %v1084 = vadd.f32 %v1064, %v1083
    %1085 = vdwg.mxu0
    %1086 = vmatpush.msra.mxu0 %v1029
    %1087 = vmatpush.msra.mxu0 %v1028
    %1088 = vmatpush.msra.mxu0 %v1027
    %1089 = vmatpush.msra.mxu0 %v1026
    %1090 = vmatpush.msra.mxu0 %v1025
    %1091 = vmatpush.msra.mxu0 %v1024
    %1092 = vmatpush.msra.mxu0 %v1023
    %1093 = vmatpush.msra.mxu0 %v1022
    %1094 = vmatpush.msra.mxu0 %v1021
    %1095 = vmatpush.msra.mxu0 %v1020
    %1096 = vmatpush.msra.mxu0 %v1019
    %1097 = vmatpush.msra.mxu0 %v1018
    %1098 = vmatpush.msra.mxu0 %v1017
    %1099 = vmatpush.msra.mxu0 %v1016
    %1100 = vmatpush.msra.mxu0 %v1015
    %1101 = vmatpush.msra.mxu0 %v1014
    %1102 = vmatmul.f32.gmra.mxu0 %v995
    %v1103 = vpop.f32.mrf.mxu0
    %v1104 = vadd.f32 %v1084, %v1103
    %1105 = vdwg.mxu0
    %1106 = vmatpush.msra.mxu0 %v1045
    %1107 = vmatpush.msra.mxu0 %v1044
    %1108 = vmatpush.msra.mxu0 %v1043
    %1109 = vmatpush.msra.mxu0 %v1042
    %1110 = vmatpush.msra.mxu0 %v1041
    %1111 = vmatpush.msra.mxu0 %v1040
    %1112 = vmatpush.msra.mxu0 %v1039
    %1113 = vmatpush.msra.mxu0 %v1038
    %1114 = vmatpush.msra.mxu0 %v1037
    %1115 = vmatpush.msra.mxu0 %v1036
    %1116 = vmatpush.msra.mxu0 %v1035
    %1117 = vmatpush.msra.mxu0 %v1034
    %1118 = vmatpush.msra.mxu0 %v1033
    %1119 = vmatpush.msra.mxu0 %v1032
    %1120 = vmatpush.msra.mxu0 %v1031
    %1121 = vmatpush.msra.mxu0 %v1030
    %1122 = vmatmul.f32.gmra.mxu0 %v996
    %v1123 = vpop.f32.mrf.mxu0
    %v1124 = vadd.f32 %v1104, %v1123
    %1125 = vdwg.mxu0
    %1126 = vmatpush.msra.mxu0 %v1061
    %1127 = vmatpush.msra.mxu0 %v1060
    %1128 = vmatpush.msra.mxu0 %v1059
    %1129 = vmatpush.msra.mxu0 %v1058
    %1130 = vmatpush.msra.mxu0 %v1057
    %1131 = vmatpush.msra.mxu0 %v1056
    %1132 = vmatpush.msra.mxu0 %v1055
    %1133 = vmatpush.msra.mxu0 %v1054
    %1134 = vmatpush.msra.mxu0 %v1053
    %1135 = vmatpush.msra.mxu0 %v1052
    %1136 = vmatpush.msra.mxu0 %v1051
    %1137 = vmatpush.msra.mxu0 %v1050
    %1138 = vmatpush.msra.mxu0 %v1049
    %1139 = vmatpush.msra.mxu0 %v1048
    %1140 = vmatpush.msra.mxu0 %v1047
    %1141 = vmatpush.msra.mxu0 %v1046
    %1142 = vmatmul.f32.gmra.mxu0 %v997
    %v1143 = vpop.f32.mrf.mxu0
    %v1144 = vadd.f32 %v1124, %v1143
    %1145 = vdwg.mxu0
    %1146 = vst [vmem:[#allocation2] sm:$0xff] %v1144
    // Predicated region
    $region22: #{neural_net_forward.1} parent=1 // pred_check
      _
    $region23: #{neural_net_forward.1} parent=1 // pred_check_branch
      %1148 = sbr.rel (0) target = $region25
    $region24: #{neural_net_forward.1} parent=1 // pred_region
      %1150 = vsyncadd [#allocation3], 0
      %s1152 = sshll.u32 [#allocation2], 4
      %s1153 = int_to_ptr.vmem [resolvable:$true] %s1152
      %s1154 = sshll.u32 %s5, 4
      %s1155 = int_to_ptr.hbm [resolvable:$true] %s1154
      %1157 = dma.vmem_to_hbm [thread:$0]  %s1153, 128, %s1155, [#allocation3]
    $region25: #{neural_net_forward.1} parent=1 // pred_fallthru
      _
    // Predicated region
    $region26: #{neural_net_forward.1} parent=1 // pred_check
      _
    $region27: #{neural_net_forward.1} parent=1 // pred_check_branch
      %1159 = sbr.rel (0) target = $region29
    $region28: #{neural_net_forward.1} parent=1 // pred_region
      %1161 = dma.done [#allocation3], 128
    $region29: #{neural_net_forward.1} parent=1 // pred_fallthru
      _
    %1162 = vsyncpa [#allocation3], 1

</llo_original>
